<compile_context>
chip_gen: v6e
topology: v6e:2x2x1
jax: 0.10.0
libtpu: 0.0.40
codegen_flags: <defaults>
</compile_context>

<pallas_src>
import functools

import jax
import jax.numpy as jnp
from jax.experimental import pallas as pl
from jax.experimental.pallas import tpu as pltpu

_EPS = 1e-5
_MXU_ROWS = 256   # target M rows per grid step (256-row MXU on v6e/v7x; a
                  # 32..256-row block also keeps v5e's 128-row MXU busy)


# ----------------------------------------------------------------------------
# Kernel
# ----------------------------------------------------------------------------
def _resblock_kernel(x_ref, w1_ref, t1_ref, w2_ref, t2_ref, o_ref):
    """One block of `bb` images.

    x_ref : (bb, H, W*C)   f32 input rows; also serves as the residual
    w1/w2 : (3*W*C, W*C)   banded conv weights, BN scale folded in (compute dt)
    t1/t2 : (1, W*C)       folded BN shift + conv bias (f32)
    o_ref : (bb, H, W*C)   output (f32)
    """
    bb, H, WC = x_ref.shape
    cd = w1_ref.dtype                                    # matmul compute dtype

    x_f32 = x_ref[...]                                   # residual stays f32
    z = jnp.zeros((bb, 1, WC), cd)

    def band_lhs(rows):                                  # rows: (bb,H,WC) in cd
        # Per-image zero H-edge rows inserted BEFORE the (bb,H)->(bb*H) merge
        # so adjacent images never leak into each other's 3x3 window.
        up = jnp.concatenate([z, rows[:, :H - 1]], axis=1)   # row y-1
        dn = jnp.concatenate([rows[:, 1:], z], axis=1)        # row y+1
        return jnp.concatenate([up, rows, dn], axis=-1).reshape(bb * H, 3 * WC)

    # conv1 (+BN1 scale folded into w1) -> +shift -> ReLU
    y1 = jnp.dot(band_lhs(x_f32.astype(cd)), w1_ref[...],
                 preferred_element_type=jnp.float32)
    h1 = jnp.maximum(y1.reshape(bb, H, WC) + t1_ref[...], 0.0)

    # conv2 (+BN2 scale folded into w2) -> +shift
    y2 = jnp.dot(band_lhs(h1.astype(cd)), w2_ref[...],
                 preferred_element_type=jnp.float32)
    h2 = y2.reshape(bb, H, WC) + t2_ref[...]

    # residual add + final ReLU: all-f32 epilogue on the VPU
    o_ref[...] = jnp.maximum(h2 + x_f32, 0.0).astype(o_ref.dtype)


# ----------------------------------------------------------------------------
# One-time (offline) weight preparation -- hoisted out of the hot path
# ----------------------------------------------------------------------------
def _banded_weight(w_oihw, scale, W):
    """(Cout, Cin, 3, 3) conv weight -> (3*W*Cin, W*Cout) banded matrix.

    Encodes the three horizontal taps + W-edge zero padding of a 3x3 conv
    (padding=1, stride=1) and folds the per-output-channel BN scale in.
    Wmat[ky*W*Cin + xi*Cin + ci, xo*Cout + co] =
        scale[co] * w[co, ci, ky, xi - xo + 1]   if 0 <= xi - xo + 1 <= 2
    """
    w = jnp.transpose(w_oihw, (2, 3, 1, 0)) * scale[None, None, None, :]
    Cin, Cout = w.shape[2], w.shape[3]
    xi = jnp.arange(W)[:, None]
    xo = jnp.arange(W)[None, :]
    kx = xi - xo + 1                                           # (W, W)
    valid = ((kx >= 0) & (kx <= 2)).astype(w.dtype)
    sel = w[:, jnp.clip(kx, 0, 2)]                             # (3, W, W, Cin, Cout)
    sel = sel * valid[None, :, :, None, None]
    sel = jnp.transpose(sel, (0, 1, 3, 2, 4))                  # (ky, xi, Cin, xo, Cout)
    return sel.reshape(3 * W * Cin, W * Cout)


def prepare_resblock_params(params, W, compute_dtype=jnp.bfloat16):
    """Fold BN into the conv weights ONCE (inference). Not in the hot path."""
    def fold(w, b, g, be, m, v):
        scale = g * jax.lax.rsqrt(v + _EPS)
        shift = be + scale * (b - m)
        wb = _banded_weight(w, scale, W).astype(compute_dtype)
        return wb, jnp.tile(shift, W).reshape(1, -1).astype(jnp.float32)

    w1f, t1 = fold(params["w1"], params["b1"], params["g1"], params["be1"],
                   params["m1"], params["v1"])
    w2f, t2 = fold(params["w2"], params["b2"], params["g2"], params["be2"],
                   params["m2"], params["v2"])
    return {"w1f": w1f, "t1": t1, "w2f": w2f, "t2": t2}


# ----------------------------------------------------------------------------
# Hot path
# ----------------------------------------------------------------------------
@jax.jit
def residual_block_pallas_flat(x, folded):
    """x: (B, H, W*C) float32 (NHWC flattened on the lane axis)."""
    B, H, WC = x.shape
    w1f, t1 = folded["w1f"], folded["t1"]
    w2f, t2 = folded["w2f"], folded["t2"]

    # Fold the batch into the matmul M dimension: the largest divisor of B
    # whose block has <= _MXU_ROWS rows.  For B=2, H=16 this is the whole
    # batch in ONE grid step (M = 32 rows, a single pallas invocation).
    bb = 1
    for d in range(1, B + 1):
        if B % d == 0 and d * H <= _MXU_ROWS:
            bb = d
    steps = B // bb

    # Explicit VMEM budget derived from actual buffer sizes (visible per
    # generation instead of a magic constant): IO blocks double-buffered,
    # grid-invariant weights single-buffered, plus in-kernel temporaries.
    wbytes = jnp.dtype(w1f.dtype).itemsize
    io_block = bb * H * WC * 4
    weight_bytes = 2 * (3 * WC * WC) * wbytes + 2 * WC * 4
    temp_bytes = 2 * bb * H * 3 * WC * wbytes + 4 * bb * H * WC * 4
    vmem_limit = int(min(64 * 2 ** 20,
                         max(16 * 2 ** 20,
                             2 * (4 * io_block + weight_bytes + temp_bytes))))

    inv = pl.Buffered(1)   # weights/shifts are grid-invariant: single buffer
    return pl.pallas_call(
        _resblock_kernel,
        out_shape=jax.ShapeDtypeStruct((B, H, WC), x.dtype),
        grid=(steps,),
        in_specs=[
            pl.BlockSpec((bb, H, WC), lambda g: (g, 0, 0)),   # input + residual
            pl.BlockSpec((3 * WC, WC), lambda g: (0, 0), pipeline_mode=inv),
            pl.BlockSpec((1, WC), lambda g: (0, 0), pipeline_mode=inv),
            pl.BlockSpec((3 * WC, WC), lambda g: (0, 0), pipeline_mode=inv),
            pl.BlockSpec((1, WC), lambda g: (0, 0), pipeline_mode=inv),
        ],
        out_specs=pl.BlockSpec((bb, H, WC), lambda g: (g, 0, 0)),
        compiler_params=pltpu.CompilerParams(
            # Megacore split only pays once there are several >=1us blocks;
            # with a single block it is pure overhead.
            dimension_semantics=("parallel",) if steps > 1 else ("arbitrary",),
            vmem_limit_bytes=vmem_limit),
    )(x, w1f, t1, w2f, t2)


def residual_block_pallas_nchw(x_nchw, folded):
    """Convenience wrapper for PyTorch NCHW layout.

    NOTE: the two transposes read+write the whole tensor in HBM; carry the
    (B, H, W*C) layout through the surrounding model when possible and call
    residual_block_pallas_flat directly.
    """
    B, C, H, W = x_nchw.shape
    x = jnp.transpose(x_nchw, (0, 2, 3, 1)).reshape(B, H, W * C)
    out = residual_block_pallas_flat(x, folded)
    return jnp.transpose(out.reshape(B, H, W, C), (0, 3, 1, 2))


# ----------------------------------------------------------------------------
# Reference + test
# ----------------------------------------------------------------------------
def _reference_jax(x_nchw, params):
    """Plain-JAX reference (lax conv) for correctness check."""
    x = jnp.transpose(x_nchw, (0, 2, 3, 1))

    def conv(h, w_oihw, b):
        w_hwio = jnp.transpose(w_oihw, (2, 3, 1, 0))
        y = jax.lax.conv_general_dilated(
            h, w_hwio, window_strides=(1, 1), padding="SAME",
            dimension_numbers=("NHWC", "HWIO", "NHWC"))
        return y + b

    def bn(h, g, be, m, v):
        return g * (h - m) / jnp.sqrt(v + _EPS) + be

    h = jax.nn.relu(bn(conv(x, params["w1"], params["b1"]),
                       params["g1"], params["be1"], params["m1"], params["v1"]))
    h = bn(conv(h, params["w2"], params["b2"]),
           params["g2"], params["be2"], params["m2"], params["v2"])
    out = jax.nn.relu(h + x)
    return jnp.transpose(out, (0, 3, 1, 2))


if __name__ == "__main__":
    B, C, H, W = 2, 4, 16, 16   # module defaults: stride=1, no downsample
    ks = jax.random.split(jax.random.PRNGKey(0), 13)

    params = {
        "w1": jax.random.normal(ks[0], (C, C, 3, 3), jnp.float32) * 0.1,
        "b1": jax.random.normal(ks[1], (C,), jnp.float32) * 0.1,
        "g1": 1.0 + 0.1 * jax.random.normal(ks[2], (C,), jnp.float32),
        "be1": 0.1 * jax.random.normal(ks[3], (C,), jnp.float32),
        "m1": 0.1 * jax.random.normal(ks[4], (C,), jnp.float32),
        "v1": 1.0 + 0.1 * jax.random.uniform(ks[5], (C,), jnp.float32),
        "w2": jax.random.normal(ks[6], (C, C, 3, 3), jnp.float32) * 0.1,
        "b2": jax.random.normal(ks[7], (C,), jnp.float32) * 0.1,
        "g2": 1.0 + 0.1 * jax.random.normal(ks[8], (C,), jnp.float32),
        "be2": 0.1 * jax.random.normal(ks[9], (C,), jnp.float32),
        "m2": 0.1 * jax.random.normal(ks[10], (C,), jnp.float32),
        "v2": 1.0 + 0.1 * jax.random.uniform(ks[11], (C,), jnp.float32),
    }
    x = jax.random.normal(ks[12], (B, C, H, W), jnp.float32)

    ref = jax.block_until_ready(_reference_jax(x, params))

    # Exact path: f32 matmul inputs.
    folded_f32 = prepare_resblock_params(params, W, compute_dtype=jnp.float32)
    out_f32 = jax.block_until_ready(residual_block_pallas_nchw(x, folded_f32))
    assert out_f32.shape == (B, C, H, W)
    err = float(jnp.max(jnp.abs(out_f32 - ref)))
    assert jnp.allclose(out_f32, ref, atol=1e-4, rtol=1e-4), f"f32 max abs err = {err}"

    # Default path (all generations): bf16 matmul inputs, f32 acc + epilogue.
    folded_bf16 = prepare_resblock_params(params, W)   # bf16 default
    out_bf16 = jax.block_until_ready(residual_block_pallas_nchw(x, folded_bf16))
    err_bf = float(jnp.max(jnp.abs(out_bf16 - ref)))
    assert jnp.allclose(out_bf16, ref, atol=1e-1, rtol=1e-1), f"bf16 max abs err = {err_bf}"

    print("KERNEL_OK")
</pallas_src>

<mosaic_0001>
module attributes {stable_mosaic.version = 11 : i64} {
  func.func @_resblock_kernel(%arg0: i32, %arg1: memref<2x16x64xf32, #tpu.memory_space<vmem>>, %arg2: memref<192x64xf32, #tpu.memory_space<vmem>>, %arg3: memref<1x64xf32, #tpu.memory_space<vmem>>, %arg4: memref<192x64xf32, #tpu.memory_space<vmem>>, %arg5: memref<1x64xf32, #tpu.memory_space<vmem>>, %arg6: memref<2x16x64xf32, #tpu.memory_space<vmem>>) attributes {dimension_semantics = [#tpu.dimension_semantics<arbitrary>], iteration_bounds = array<i64: 1>, scalar_prefetch = 0 : i64, scratch_operands = 0 : i64, tpu.core_type = #tpu.core_type<tc>, window_params = [{transform_indices = @transform_0, window_bounds = array<i64: 2, 16, 64>}, {pipeline_mode = #tpu.pipeline_mode<synchronous>, transform_indices = @transform_1, window_bounds = array<i64: 192, 64>}, {pipeline_mode = #tpu.pipeline_mode<synchronous>, transform_indices = @transform_2, window_bounds = array<i64: 1, 64>}, {pipeline_mode = #tpu.pipeline_mode<synchronous>, transform_indices = @transform_3, window_bounds = array<i64: 192, 64>}, {pipeline_mode = #tpu.pipeline_mode<synchronous>, transform_indices = @transform_4, window_bounds = array<i64: 1, 64>}, {transform_indices = @transform_5, window_bounds = array<i64: 2, 16, 64>}]} {
    %c0 = arith.constant 0 : index
    %c0_0 = arith.constant 0 : index
    %c0_1 = arith.constant 0 : index
    %0 = vector.load %arg1[%c0, %c0_0, %c0_1] : memref<2x16x64xf32, #tpu.memory_space<vmem>>, vector<2x16x64xf32>
    %cst = arith.constant 0.000000e+00 : f32
    %1 = vector.broadcast %cst : f32 to vector<2x1x64xf32>
    %2 = vector.extract_strided_slice %0 {offsets = [0, 0, 0], sizes = [2, 15, 64], strides = [1, 1, 1]} : vector<2x16x64xf32> to vector<2x15x64xf32>
    %3 = tpu.concatenate %1, %2 in 1 : vector<2x1x64xf32>, vector<2x15x64xf32> -> vector<2x16x64xf32>
    %4 = vector.extract_strided_slice %0 {offsets = [0, 1, 0], sizes = [2, 15, 64], strides = [1, 1, 1]} : vector<2x16x64xf32> to vector<2x15x64xf32>
    %5 = tpu.concatenate %4, %1 in 1 : vector<2x15x64xf32>, vector<2x1x64xf32> -> vector<2x16x64xf32>
    %6 = tpu.concatenate %3, %0, %5 in 2 : vector<2x16x64xf32>, vector<2x16x64xf32>, vector<2x16x64xf32> -> vector<2x16x192xf32>
    %7 = vector.shape_cast %6 : vector<2x16x192xf32> to vector<32x192xf32>
    %c0_2 = arith.constant 0 : index
    %c0_3 = arith.constant 0 : index
    %8 = vector.load %arg2[%c0_2, %c0_3] : memref<192x64xf32, #tpu.memory_space<vmem>>, vector<192x64xf32>
    %cst_4 = arith.constant dense<0.000000e+00> : vector<32x64xf32>
    %9 = tpu.matmul %7, %8, %cst_4 {dimension_numbers = #tpu.dot_dimension_numbers<[1], [0], [0], [1], [0, 0, 1, 1], [], []>} : vector<32x192xf32>, vector<192x64xf32>, vector<32x64xf32> -> vector<32x64xf32>
    %10 = vector.shape_cast %9 : vector<32x64xf32> to vector<2x16x64xf32>
    %c0_5 = arith.constant 0 : index
    %c0_6 = arith.constant 0 : index
    %11 = vector.load %arg3[%c0_5, %c0_6] : memref<1x64xf32, #tpu.memory_space<vmem>>, vector<1x64xf32>
    %12 = vector.shape_cast %11 : vector<1x64xf32> to vector<1x1x64xf32>
    %13 = vector.broadcast %12 : vector<1x1x64xf32> to vector<2x16x64xf32>
    %14 = arith.addf %10, %13 : vector<2x16x64xf32>
    %cst_7 = arith.constant 0.000000e+00 : f32
    %15 = vector.broadcast %cst_7 : f32 to vector<2x16x64xf32>
    %16 = arith.maximumf %14, %15 : vector<2x16x64xf32>
    %17 = vector.extract_strided_slice %16 {offsets = [0, 0, 0], sizes = [2, 15, 64], strides = [1, 1, 1]} : vector<2x16x64xf32> to vector<2x15x64xf32>
    %18 = tpu.concatenate %1, %17 in 1 : vector<2x1x64xf32>, vector<2x15x64xf32> -> vector<2x16x64xf32>
    %19 = vector.extract_strided_slice %16 {offsets = [0, 1, 0], sizes = [2, 15, 64], strides = [1, 1, 1]} : vector<2x16x64xf32> to vector<2x15x64xf32>
    %20 = tpu.concatenate %19, %1 in 1 : vector<2x15x64xf32>, vector<2x1x64xf32> -> vector<2x16x64xf32>
    %21 = tpu.concatenate %18, %16, %20 in 2 : vector<2x16x64xf32>, vector<2x16x64xf32>, vector<2x16x64xf32> -> vector<2x16x192xf32>
    %22 = vector.shape_cast %21 : vector<2x16x192xf32> to vector<32x192xf32>
    %c0_8 = arith.constant 0 : index
    %c0_9 = arith.constant 0 : index
    %23 = vector.load %arg4[%c0_8, %c0_9] : memref<192x64xf32, #tpu.memory_space<vmem>>, vector<192x64xf32>
    %cst_10 = arith.constant dense<0.000000e+00> : vector<32x64xf32>
    %24 = tpu.matmul %22, %23, %cst_10 {dimension_numbers = #tpu.dot_dimension_numbers<[1], [0], [0], [1], [0, 0, 1, 1], [], []>} : vector<32x192xf32>, vector<192x64xf32>, vector<32x64xf32> -> vector<32x64xf32>
    %25 = vector.shape_cast %24 : vector<32x64xf32> to vector<2x16x64xf32>
    %c0_11 = arith.constant 0 : index
    %c0_12 = arith.constant 0 : index
    %26 = vector.load %arg5[%c0_11, %c0_12] : memref<1x64xf32, #tpu.memory_space<vmem>>, vector<1x64xf32>
    %27 = vector.shape_cast %26 : vector<1x64xf32> to vector<1x1x64xf32>
    %28 = vector.broadcast %27 : vector<1x1x64xf32> to vector<2x16x64xf32>
    %29 = arith.addf %25, %28 : vector<2x16x64xf32>
    %30 = arith.addf %29, %0 : vector<2x16x64xf32>
    %cst_13 = arith.constant 0.000000e+00 : f32
    %31 = vector.broadcast %cst_13 : f32 to vector<2x16x64xf32>
    %32 = arith.maximumf %30, %31 : vector<2x16x64xf32>
    %c0_14 = arith.constant 0 : index
    %c0_15 = arith.constant 0 : index
    %c0_16 = arith.constant 0 : index
    %33 = vector.load %arg6[%c0_14, %c0_15, %c0_16] : memref<2x16x64xf32, #tpu.memory_space<vmem>>, vector<2x16x64xf32>
    tpu.vector_store %arg6[%c0_14, %c0_15, %c0_16], %32 {strides = array<i32>} : memref<2x16x64xf32, #tpu.memory_space<vmem>>, vector<2x16x64xf32>,
    return
  }
  func.func @transform_0(%arg0: i32) -> (i32, i32, i32) {
    %c0_i32 = arith.constant 0 : i32
    %c0_i32_0 = arith.constant 0 : i32
    %c0_i32_1 = arith.constant 0 : i32
    return %arg0, %c0_i32, %c0_i32_0 : i32, i32, i32
  }
  func.func @transform_1(%arg0: i32) -> (i32, i32) {
    %c0_i32 = arith.constant 0 : i32
    %c0_i32_0 = arith.constant 0 : i32
    %c0_i32_1 = arith.constant 0 : i32
    return %c0_i32, %c0_i32_0 : i32, i32
  }
  func.func @transform_2(%arg0: i32) -> (i32, i32) {
    %c0_i32 = arith.constant 0 : i32
    %c0_i32_0 = arith.constant 0 : i32
    %c0_i32_1 = arith.constant 0 : i32
    return %c0_i32, %c0_i32_0 : i32, i32
  }
  func.func @transform_3(%arg0: i32) -> (i32, i32) {
    %c0_i32 = arith.constant 0 : i32
    %c0_i32_0 = arith.constant 0 : i32
    %c0_i32_1 = arith.constant 0 : i32
    return %c0_i32, %c0_i32_0 : i32, i32
  }
  func.func @transform_4(%arg0: i32) -> (i32, i32) {
    %c0_i32 = arith.constant 0 : i32
    %c0_i32_0 = arith.constant 0 : i32
    %c0_i32_1 = arith.constant 0 : i32
    return %c0_i32, %c0_i32_0 : i32, i32
  }
  func.func @transform_5(%arg0: i32) -> (i32, i32, i32) {
    %c0_i32 = arith.constant 0 : i32
    %c0_i32_0 = arith.constant 0 : i32
    %c0_i32_1 = arith.constant 0 : i32
    return %arg0, %c0_i32, %c0_i32_0 : i32, i32, i32
  }
}

</mosaic_0001>

<llo_original>
// kernel: residual_block_pallas_flat.1
$region0: #{residual_block_pallas_flat.1}
  #allocation0 [shape = 'u32[]', space=smem, size = 0x4, offset = 0x4, fixed_abs, tag = 'smem constant byte address 0x4 - core index']
  #allocation1 [shape = 'u32[144,128]{1,0:T(1,128)}', space=vmem, size = 0x12000, scoped, tag = 'internal scratch']
  %s0 = inlined_call_operand.vmem [shape: f32[2,16,64], index: 0, kind: input, shape index: {}]
  %s1 = inlined_call_operand.vmem [shape: f32[192,64], index: 1, kind: input, shape index: {}]
  %s2 = inlined_call_operand.vmem [shape: f32[1,64], index: 2, kind: input, shape index: {}]
  %s3 = inlined_call_operand.vmem [shape: f32[192,64], index: 3, kind: input, shape index: {}]
  %s4 = inlined_call_operand.vmem [shape: f32[1,64], index: 4, kind: input, shape index: {}]
  %s5 = inlined_call_operand.hbm [shape: f32[2,16,64], index: 5, kind: output, shape index: {}]
  %s6 = sld [smem:[#allocation0]]
  $region30: #{residual_block_pallas_flat.1} parent=0
    _
  %s8 = ssub.s32 1, %s6
  %s9 = scalar_select 0, %s8, %s6
  $region1: #{residual_block_pallas_flat.1} parent=0
    #allocation2 [shape = 'u8[16384]{0}', space=vmem, size = 0x4000, scoped, tag = 'output window, operand 0, single buffered']
    #allocation3 [shape = 's32[1]{0}', space=sflag, size = 0x4, scoped, tag = 'scoped memory for residual_block_pallas_flat.1']
    %10 = vsyncpa [#allocation3], 0
    // Predicated region
    $region2: #{residual_block_pallas_flat.1} parent=1 // pred_check
      _
    $region3: #{residual_block_pallas_flat.1} parent=1 // pred_check_branch
      %12 = sbr.rel (0) target = $region5
    $region4: #{residual_block_pallas_flat.1} parent=1 // pred_region
      _
    $region5: #{residual_block_pallas_flat.1} parent=1 // pred_fallthru
      _
    // Predicated region
    $region6: #{residual_block_pallas_flat.1} parent=1 // pred_check
      _
    $region7: #{residual_block_pallas_flat.1} parent=1 // pred_check_branch
      %14 = sbr.rel (0) target = $region9
    $region8: #{residual_block_pallas_flat.1} parent=1 // pred_region
      _
    $region9: #{residual_block_pallas_flat.1} parent=1 // pred_fallthru
      _
    // Predicated region
    $region10: #{residual_block_pallas_flat.1} parent=1 // pred_check
      _
    $region11: #{residual_block_pallas_flat.1} parent=1 // pred_check_branch
      %16 = sbr.rel (0) target = $region13
    $region12: #{residual_block_pallas_flat.1} parent=1 // pred_region
      _
    $region13: #{residual_block_pallas_flat.1} parent=1 // pred_fallthru
      _
    // Predicated region
    $region14: #{residual_block_pallas_flat.1} parent=1 // pred_check
      _
    $region15: #{residual_block_pallas_flat.1} parent=1 // pred_check_branch
      %18 = sbr.rel (0) target = $region17
    $region16: #{residual_block_pallas_flat.1} parent=1 // pred_region
      _
    $region17: #{residual_block_pallas_flat.1} parent=1 // pred_fallthru
      _
    // Predicated region
    $region18: #{residual_block_pallas_flat.1} parent=1 // pred_check
      _
    $region19: #{residual_block_pallas_flat.1} parent=1 // pred_check_branch
      %20 = sbr.rel (0) target = $region21
    $region20: #{residual_block_pallas_flat.1} parent=1 // pred_region
      _
    $region21: #{residual_block_pallas_flat.1} parent=1 // pred_fallthru
      _
    %v21 = vld [vmem:[%s0] sm:$0xff]
    %v22 = vld [vmem:[%s0 + $0x8] sm:$0xff]
    %v23 = vld [vmem:[%s0 + $0x10] sm:$0xff]
    %v24 = vld [vmem:[%s0 + $0x18] sm:$0xff]
    %vm29 = vcmask 1040384
    %v30 = vrot.slane %v21, 7
    %v31 = vrot.slane %v22, 7
    %v32 = vsel %vm29, %v30, %v31
    %v33 = vrot.slane %v23, 7
    %v34 = vrot.slane %v24, 7
    %v35 = vsel %vm29, %v33, %v34
    %v40 = vsel %vm29, 0.0, %v30
    %v41 = vsel %vm29, 0.0, %v33
    %vm42 = vcmask 1046528
    %v43 = vrot.slane %v21, 1
    %v44 = vrot.slane %v22, 1
    %v45 = vsel %vm42, %v43, %v44
    %v46 = vrot.slane %v23, 1
    %v47 = vrot.slane %v24, 1
    %v48 = vsel %vm42, %v46, %v47
    %v51 = vsel %vm42, %v44, 0.0
    %v52 = vsel %vm42, %v47, 0.0
    %53 = vrot.lane.b32.xlu0 %v21, 64
    %v54 = vpop.permute.xlu0 %53
    %55 = vrot.lane.b32.xlu0 %v22, 64
    %v56 = vpop.permute.xlu0 %55
    %57 = vrot.lane.b32.xlu0 %v23, 64
    %v58 = vpop.permute.xlu0 %57
    %59 = vrot.lane.b32.xlu0 %v24, 64
    %v60 = vpop.permute.xlu0 %59
    %vm65 = vcmask 523264
    %v66 = vsel %vm65, %v40, %v54
    %v67 = vsel %vm65, %v32, %v56
    %v68 = vsel %vm65, %v41, %v58
    %v69 = vsel %vm65, %v35, %v60
    %v70 = vld [vmem:[%s1] sm:$0xff]
    %v71 = vld [vmem:[%s1 + $0x8] sm:$0xff]
    %v72 = vld [vmem:[%s1 + $0x10] sm:$0xff]
    %v73 = vld [vmem:[%s1 + $0x18] sm:$0xff]
    %v74 = vld [vmem:[%s1 + $0x20] sm:$0xff]
    %v75 = vld [vmem:[%s1 + $0x28] sm:$0xff]
    %v76 = vld [vmem:[%s1 + $0x30] sm:$0xff]
    %v77 = vld [vmem:[%s1 + $0x38] sm:$0xff]
    %v78 = vld [vmem:[%s1 + $0x40] sm:$0xff]
    %v79 = vld [vmem:[%s1 + $0x48] sm:$0xff]
    %v80 = vld [vmem:[%s1 + $0x50] sm:$0xff]
    %v81 = vld [vmem:[%s1 + $0x58] sm:$0xff]
    %v82 = vld [vmem:[%s1 + $0x60] sm:$0xff]
    %v83 = vld [vmem:[%s1 + $0x68] sm:$0xff]
    %v84 = vld [vmem:[%s1 + $0x70] sm:$0xff]
    %v85 = vld [vmem:[%s1 + $0x78] sm:$0xff]
    %v86 = vld [vmem:[%s1 + $0x80] sm:$0xff]
    %v87 = vld [vmem:[%s1 + $0x88] sm:$0xff]
    %v88 = vld [vmem:[%s1 + $0x90] sm:$0xff]
    %v89 = vld [vmem:[%s1 + $0x98] sm:$0xff]
    %v90 = vld [vmem:[%s1 + $0xa0] sm:$0xff]
    %v91 = vld [vmem:[%s1 + $0xa8] sm:$0xff]
    %v92 = vld [vmem:[%s1 + $0xb0] sm:$0xff]
    %v93 = vld [vmem:[%s1 + $0xb8] sm:$0xff]
    %v94 = vsel %vm65, %v45, 0
    %v97 = vsel %vm65, %v51, 0
    %v99 = vsel %vm65, %v48, 0
    %v102 = vsel %vm65, %v52, 0
    %104 = vmatprep.subr.mxu0 0.0
    %105 = vmatpush1.msra.mxu0 %v85
    %106 = vmatprep.subr.mxu0 0.0
    %107 = vmatpush1.msra.mxu0 %v84
    %108 = vmatprep.subr.mxu0 0.0
    %109 = vmatpush1.msra.mxu0 %v83
    %110 = vmatprep.subr.mxu0 0.0
    %111 = vmatpush1.msra.mxu0 %v82
    %112 = vmatprep.subr.mxu0 0.0
    %113 = vmatpush1.msra.mxu0 %v81
    %114 = vmatprep.subr.mxu0 0.0
    %115 = vmatpush1.msra.mxu0 %v80
    %116 = vmatprep.subr.mxu0 0.0
    %117 = vmatpush1.msra.mxu0 %v79
    %118 = vmatprep.subr.mxu0 0.0
    %119 = vmatpush1.msra.mxu0 %v78
    %120 = vmatprep.subr.mxu0 0.0
    %121 = vmatpush1.msra.mxu0 %v77
    %122 = vmatprep.subr.mxu0 0.0
    %123 = vmatpush1.msra.mxu0 %v76
    %124 = vmatprep.subr.mxu0 0.0
    %125 = vmatpush1.msra.mxu0 %v75
    %126 = vmatprep.subr.mxu0 0.0
    %127 = vmatpush1.msra.mxu0 %v74
    %128 = vmatprep.subr.mxu0 0.0
    %129 = vmatpush1.msra.mxu0 %v73
    %130 = vmatprep.subr.mxu0 0.0
    %131 = vmatpush1.msra.mxu0 %v72
    %132 = vmatprep.subr.mxu0 0.0
    %133 = vmatpush1.msra.mxu0 %v71
    %134 = vmatprep.subr.mxu0 0.0
    %135 = vmatpush1.msra.mxu0 %v70
    %136 = vmatprep.subr.mxu0 0.0
    %137 = vmatpush2.msra.mxu0 0.0
    %138 = vmatprep.subr.mxu0 0.0
    %139 = vmatpush2.msra.mxu0 0.0
    %140 = vmatprep.subr.mxu0 0.0
    %141 = vmatpush2.msra.mxu0 0.0
    %142 = vmatprep.subr.mxu0 0.0
    %143 = vmatpush2.msra.mxu0 0.0
    %144 = vmatprep.subr.mxu0 0.0
    %145 = vmatpush2.msra.mxu0 0.0
    %146 = vmatprep.subr.mxu0 0.0
    %147 = vmatpush2.msra.mxu0 0.0
    %148 = vmatprep.subr.mxu0 0.0
    %149 = vmatpush2.msra.mxu0 0.0
    %150 = vmatprep.subr.mxu0 0.0
    %151 = vmatpush2.msra.mxu0 0.0
    %152 = vmatprep.subr.mxu0 0.0
    %153 = vmatpush2.msra.mxu0 %v93
    %154 = vmatprep.subr.mxu0 0.0
    %155 = vmatpush2.msra.mxu0 %v92
    %156 = vmatprep.subr.mxu0 0.0
    %157 = vmatpush2.msra.mxu0 %v91
    %158 = vmatprep.subr.mxu0 0.0
    %159 = vmatpush2.msra.mxu0 %v90
    %160 = vmatprep.subr.mxu0 0.0
    %161 = vmatpush2.msra.mxu0 %v89
    %162 = vmatprep.subr.mxu0 0.0
    %163 = vmatpush2.msra.mxu0 %v88
    %164 = vmatprep.subr.mxu0 0.0
    %165 = vmatpush2.msra.mxu0 %v87
    %166 = vmatprep.subr.mxu0 0.0
    %167 = vmatpush2.msra.mxu0 %v86
    %168 = vmatprep.mubr.f32.mxu0 %v94
    %169 = vmatmul.mubr.f32.gmra.mxu0 %v66
    %v170 = vpop.f32.mrf.mxu0
    %v171 = vadd.f32 0.0, %v170
    %v172 = vpop.f32.mrf.mxu0
    %173 = vmatprep.mubr.f32.mxu0 %v97
    %174 = vmatmul.mubr.f32.gmra.mxu0 %v67
    %v175 = vpop.f32.mrf.mxu0
    %v176 = vadd.f32 0.0, %v175
    %v177 = vpop.f32.mrf.mxu0
    %178 = vmatprep.mubr.f32.mxu0 %v99
    %179 = vmatmul.mubr.f32.gmra.mxu0 %v68
    %v180 = vpop.f32.mrf.mxu0
    %v181 = vadd.f32 0.0, %v180
    %v182 = vpop.f32.mrf.mxu0
    %183 = vmatprep.mubr.f32.mxu0 %v102
    %184 = vmatmul.mubr.f32.gmra.mxu0 %v69
    %v185 = vpop.f32.mrf.mxu0
    %v186 = vadd.f32 0.0, %v185
    %v187 = vpop.f32.mrf.mxu0
    %188 = vdwg.mxu0
    %v189 = vld [vmem:[%s2] sm:$0x1]
    %v191 = vlaneseq
    %v192 = vshrl.u32 %v191, 7
    %v193 = vsub.s32 0, %v192
    %v194 = vrot.slane %v189, %v193
    %v196 = vadd.f32 %v171, %v194
    %v197 = vadd.f32 %v176, %v194
    %v198 = vadd.f32 %v181, %v194
    %v199 = vadd.f32 %v186, %v194
    %v200 = vmax.f32 %v196, 0.0
    %v201 = vmax.f32 %v197, 0.0
    %v202 = vmax.f32 %v198, 0.0
    %v203 = vmax.f32 %v199, 0.0
    %v208 = vrot.slane %v200, 7
    %v209 = vrot.slane %v201, 7
    %v210 = vsel %vm29, %v208, %v209
    %v211 = vrot.slane %v202, 7
    %v212 = vrot.slane %v203, 7
    %v213 = vsel %vm29, %v211, %v212
    %v218 = vsel %vm29, 0.0, %v208
    %v219 = vsel %vm29, 0.0, %v211
    %v220 = vrot.slane %v200, 1
    %v221 = vrot.slane %v201, 1
    %v222 = vsel %vm42, %v220, %v221
    %v223 = vrot.slane %v202, 1
    %v224 = vrot.slane %v203, 1
    %v225 = vsel %vm42, %v223, %v224
    %v228 = vsel %vm42, %v221, 0.0
    %v229 = vsel %vm42, %v224, 0.0
    %230 = vrot.lane.b32.xlu0 %v200, 64
    %v231 = vpop.permute.xlu0 %230
    %232 = vrot.lane.b32.xlu0 %v201, 64
    %v233 = vpop.permute.xlu0 %232
    %234 = vrot.lane.b32.xlu0 %v202, 64
    %v235 = vpop.permute.xlu0 %234
    %236 = vrot.lane.b32.xlu0 %v203, 64
    %v237 = vpop.permute.xlu0 %236
    %v242 = vsel %vm65, %v218, %v231
    %v243 = vsel %vm65, %v210, %v233
    %v244 = vsel %vm65, %v219, %v235
    %v245 = vsel %vm65, %v213, %v237
    %v246 = vld [vmem:[%s3] sm:$0xff]
    %v247 = vld [vmem:[%s3 + $0x8] sm:$0xff]
    %v248 = vld [vmem:[%s3 + $0x10] sm:$0xff]
    %v249 = vld [vmem:[%s3 + $0x18] sm:$0xff]
    %v250 = vld [vmem:[%s3 + $0x20] sm:$0xff]
    %v251 = vld [vmem:[%s3 + $0x28] sm:$0xff]
    %v252 = vld [vmem:[%s3 + $0x30] sm:$0xff]
    %v253 = vld [vmem:[%s3 + $0x38] sm:$0xff]
    %v254 = vld [vmem:[%s3 + $0x40] sm:$0xff]
    %v255 = vld [vmem:[%s3 + $0x48] sm:$0xff]
    %v256 = vld [vmem:[%s3 + $0x50] sm:$0xff]
    %v257 = vld [vmem:[%s3 + $0x58] sm:$0xff]
    %v258 = vld [vmem:[%s3 + $0x60] sm:$0xff]
    %v259 = vld [vmem:[%s3 + $0x68] sm:$0xff]
    %v260 = vld [vmem:[%s3 + $0x70] sm:$0xff]
    %v261 = vld [vmem:[%s3 + $0x78] sm:$0xff]
    %v262 = vld [vmem:[%s3 + $0x80] sm:$0xff]
    %v263 = vld [vmem:[%s3 + $0x88] sm:$0xff]
    %v264 = vld [vmem:[%s3 + $0x90] sm:$0xff]
    %v265 = vld [vmem:[%s3 + $0x98] sm:$0xff]
    %v266 = vld [vmem:[%s3 + $0xa0] sm:$0xff]
    %v267 = vld [vmem:[%s3 + $0xa8] sm:$0xff]
    %v268 = vld [vmem:[%s3 + $0xb0] sm:$0xff]
    %v269 = vld [vmem:[%s3 + $0xb8] sm:$0xff]
    %v270 = vsel %vm65, %v222, 0
    %v273 = vsel %vm65, %v228, 0
    %v275 = vsel %vm65, %v225, 0
    %v278 = vsel %vm65, %v229, 0
    %280 = vmatprep.subr.mxu0 0.0
    %281 = vmatpush1.msra.mxu0 %v261
    %282 = vmatprep.subr.mxu0 0.0
    %283 = vmatpush1.msra.mxu0 %v260
    %284 = vmatprep.subr.mxu0 0.0
    %285 = vmatpush1.msra.mxu0 %v259
    %286 = vmatprep.subr.mxu0 0.0
    %287 = vmatpush1.msra.mxu0 %v258
    %288 = vmatprep.subr.mxu0 0.0
    %289 = vmatpush1.msra.mxu0 %v257
    %290 = vmatprep.subr.mxu0 0.0
    %291 = vmatpush1.msra.mxu0 %v256
    %292 = vmatprep.subr.mxu0 0.0
    %293 = vmatpush1.msra.mxu0 %v255
    %294 = vmatprep.subr.mxu0 0.0
    %295 = vmatpush1.msra.mxu0 %v254
    %296 = vmatprep.subr.mxu0 0.0
    %297 = vmatpush1.msra.mxu0 %v253
    %298 = vmatprep.subr.mxu0 0.0
    %299 = vmatpush1.msra.mxu0 %v252
    %300 = vmatprep.subr.mxu0 0.0
    %301 = vmatpush1.msra.mxu0 %v251
    %302 = vmatprep.subr.mxu0 0.0
    %303 = vmatpush1.msra.mxu0 %v250
    %304 = vmatprep.subr.mxu0 0.0
    %305 = vmatpush1.msra.mxu0 %v249
    %306 = vmatprep.subr.mxu0 0.0
    %307 = vmatpush1.msra.mxu0 %v248
    %308 = vmatprep.subr.mxu0 0.0
    %309 = vmatpush1.msra.mxu0 %v247
    %310 = vmatprep.subr.mxu0 0.0
    %311 = vmatpush1.msra.mxu0 %v246
    %312 = vmatprep.subr.mxu0 0.0
    %313 = vmatpush2.msra.mxu0 0.0
    %314 = vmatprep.subr.mxu0 0.0
    %315 = vmatpush2.msra.mxu0 0.0
    %316 = vmatprep.subr.mxu0 0.0
    %317 = vmatpush2.msra.mxu0 0.0
    %318 = vmatprep.subr.mxu0 0.0
    %319 = vmatpush2.msra.mxu0 0.0
    %320 = vmatprep.subr.mxu0 0.0
    %321 = vmatpush2.msra.mxu0 0.0
    %322 = vmatprep.subr.mxu0 0.0
    %323 = vmatpush2.msra.mxu0 0.0
    %324 = vmatprep.subr.mxu0 0.0
    %325 = vmatpush2.msra.mxu0 0.0
    %326 = vmatprep.subr.mxu0 0.0
    %327 = vmatpush2.msra.mxu0 0.0
    %328 = vmatprep.subr.mxu0 0.0
    %329 = vmatpush2.msra.mxu0 %v269
    %330 = vmatprep.subr.mxu0 0.0
    %331 = vmatpush2.msra.mxu0 %v268
    %332 = vmatprep.subr.mxu0 0.0
    %333 = vmatpush2.msra.mxu0 %v267
    %334 = vmatprep.subr.mxu0 0.0
    %335 = vmatpush2.msra.mxu0 %v266
    %336 = vmatprep.subr.mxu0 0.0
    %337 = vmatpush2.msra.mxu0 %v265
    %338 = vmatprep.subr.mxu0 0.0
    %339 = vmatpush2.msra.mxu0 %v264
    %340 = vmatprep.subr.mxu0 0.0
    %341 = vmatpush2.msra.mxu0 %v263
    %342 = vmatprep.subr.mxu0 0.0
    %343 = vmatpush2.msra.mxu0 %v262
    %344 = vmatprep.mubr.f32.mxu0 %v270
    %345 = vmatmul.mubr.f32.gmra.mxu0 %v242
    %v346 = vpop.f32.mrf.mxu0
    %v347 = vadd.f32 0.0, %v346
    %v348 = vpop.f32.mrf.mxu0
    %349 = vmatprep.mubr.f32.mxu0 %v273
    %350 = vmatmul.mubr.f32.gmra.mxu0 %v243
    %v351 = vpop.f32.mrf.mxu0
    %v352 = vadd.f32 0.0, %v351
    %v353 = vpop.f32.mrf.mxu0
    %354 = vmatprep.mubr.f32.mxu0 %v275
    %355 = vmatmul.mubr.f32.gmra.mxu0 %v244
    %v356 = vpop.f32.mrf.mxu0
    %v357 = vadd.f32 0.0, %v356
    %v358 = vpop.f32.mrf.mxu0
    %359 = vmatprep.mubr.f32.mxu0 %v278
    %360 = vmatmul.mubr.f32.gmra.mxu0 %v245
    %v361 = vpop.f32.mrf.mxu0
    %v362 = vadd.f32 0.0, %v361
    %v363 = vpop.f32.mrf.mxu0
    %364 = vdwg.mxu0
    %v365 = vld [vmem:[%s4] sm:$0x1]
    %v367 = vlaneseq
    %v368 = vshrl.u32 %v367, 7
    %v369 = vsub.s32 0, %v368
    %v370 = vrot.slane %v365, %v369
    %v372 = vadd.f32 %v347, %v370
    %v373 = vadd.f32 %v352, %v370
    %v374 = vadd.f32 %v357, %v370
    %v375 = vadd.f32 %v362, %v370
    %v376 = vadd.f32 %v372, %v21
    %v377 = vadd.f32 %v373, %v22
    %v378 = vadd.f32 %v374, %v23
    %v379 = vadd.f32 %v375, %v24
    %v380 = vmax.f32 %v376, 0.0
    %v381 = vmax.f32 %v377, 0.0
    %v382 = vmax.f32 %v378, 0.0
    %v383 = vmax.f32 %v379, 0.0
    %384 = vst.msk [vmem:[#allocation2] sm:$0xff] %vm65, %v380
    %385 = vst.msk [vmem:[#allocation2 + $0x8] sm:$0xff] %vm65, %v381
    %386 = vst.msk [vmem:[#allocation2 + $0x10] sm:$0xff] %vm65, %v382
    %387 = vst.msk [vmem:[#allocation2 + $0x18] sm:$0xff] %vm65, %v383
    // Predicated region
    $region22: #{residual_block_pallas_flat.1} parent=1 // pred_check
      _
    $region23: #{residual_block_pallas_flat.1} parent=1 // pred_check_branch
      %389 = sbr.rel (0) target = $region25
    $region24: #{residual_block_pallas_flat.1} parent=1 // pred_region
      %s391 = ssub.s32 512, 512
      %392 = vsyncadd [#allocation3], %s391
      %s393 = sshll.u32 [#allocation2], 4
      %s394 = int_to_ptr.vmem [resolvable:$true] %s393
      %399 = dma.vmem_to_hbm [thread:$0]  %s394, 512, %s5, [#allocation3], 128, 128, 8
    $region25: #{residual_block_pallas_flat.1} parent=1 // pred_fallthru
      _
    // Predicated region
    $region26: #{residual_block_pallas_flat.1} parent=1 // pred_check
      _
    $region27: #{residual_block_pallas_flat.1} parent=1 // pred_check_branch
      %401 = sbr.rel (0) target = $region29
    $region28: #{residual_block_pallas_flat.1} parent=1 // pred_region
      %402 = dma.done [#allocation3], 512
    $region29: #{residual_block_pallas_flat.1} parent=1 // pred_fallthru
      _
    %403 = vsyncpa [#allocation3], 1

</llo_original>
